<compile_context>
chip_gen: v5e
topology: v5e:2x2
jax: 0.10.0
libtpu: 0.0.40
codegen_flags: <defaults>
</compile_context>

<pallas_src>
import functools
from dataclasses import dataclass

import jax
import jax.numpy as jnp
from jax.experimental import pallas as pl
from jax.experimental.pallas import tpu as pltpu

f32 = jnp.float32

_SINGLE_BUFFER_OK = None  # cached result of the pl.Buffered(1) capability probe


def _round_up(n, m):
    return ((n + m - 1) // m) * m


def _cdiv(a, b):
    return (a + b - 1) // b


# --------------------------------------------------------------------------
# Kernel
# --------------------------------------------------------------------------
def _make_kernel(Hp, H2p, Op):
    """Kernel closure over the (static) padded layer widths."""

    def kernel(x_ref, w1_ref, w2_ref, w3_ref, wh_ref, b_ref, out_ref):
        # All biases live in one (8, Dmax) slab; static, lane-aligned slices.
        b1 = b_ref[0:1, 0:Hp]
        b2 = b_ref[1:2, 0:Hp]
        b3 = b_ref[2:3, 0:H2p]
        bh = b_ref[3:4, 0:Op]

        def mm(a, w_ref):
            w = w_ref[...]
            # MXU operands take the weight dtype (f32 or bf16); f32 accumulate.
            return jnp.dot(a.astype(w.dtype), w, preferred_element_type=jnp.float32)

        x = x_ref[...]
        # shared_layers: Linear -> ReLU (x3). Bias add / ReLU stay in f32.
        h = jnp.maximum(mm(x, w1_ref) + b1, 0.0)
        h = jnp.maximum(mm(h, w2_ref) + b2, 0.0)
        h = jnp.maximum(mm(h, w3_ref) + b3, 0.0)
        # Fused policy+value head -> one lane-dense (Bt, Op) unmasked store.
        out_ref[...] = (mm(h, wh_ref) + bh).astype(out_ref.dtype)

    return kernel


# --------------------------------------------------------------------------
# One-time parameter preparation (hoisted out of the per-call path)
# --------------------------------------------------------------------------
@dataclass(frozen=True)
class PreparedParams:
    w1: jax.Array   # (S,   Hp)  K kept unpadded so x needs no feature padding
    w2: jax.Array   # (Hp,  Hp)
    w3: jax.Array   # (Hp,  H2p)
    wh: jax.Array   # (H2p, Op)  fused policy|value head
    b: jax.Array    # (8, Dmax)  all biases, f32
    state_dim: int
    hidden: int
    h2: int
    action_dim: int
    Hp: int
    H2p: int
    Op: int
    Dmax: int


def prepare_params(params, *, use_bf16=True):
    """Pad / fuse / cast the weights once; reuse the result for every forward.

    use_bf16=True (recommended on v6e/v7x) stores MXU operands in bf16
    (accumulation, bias add and ReLU stay f32).  use_bf16=False gives
    bit-level parity with the f32 PyTorch forward.
    """
    state_dim, hidden = params["w1"].shape
    h2 = params["w3"].shape[1]
    A = params["wp"].shape[1]

    # Lane-dense padding.  Round widths that genuinely exceed 128 up to 256 on
    # the bf16 path (matches the 256x256 v6e/v7x MXU tile); otherwise 128.
    def lane_pad(d):
        mult = 256 if (use_bf16 and d > 128) else 128
        return _round_up(d, mult)

    Hp = lane_pad(hidden)
    H2p = lane_pad(h2)
    Op = lane_pad(A + 1)            # fused policy(A) + value(1) head
    Dmax = max(Hp, H2p, Op)

    w_dtype = jnp.bfloat16 if use_bf16 else f32

    def pad2(a, r, c):
        return jnp.zeros((r, c), f32).at[: a.shape[0], : a.shape[1]].set(a.astype(f32))

    w1 = pad2(params["w1"], state_dim, Hp).astype(w_dtype)      # K unpadded
    w2 = pad2(params["w2"], Hp, Hp).astype(w_dtype)
    w3 = pad2(params["w3"], Hp, H2p).astype(w_dtype)
    wh = pad2(jnp.concatenate([params["wp"], params["wv"]], axis=1),
              H2p, Op).astype(w_dtype)

    b = jnp.zeros((8, Dmax), f32)
    b = b.at[0, :hidden].set(params["b1"].reshape(-1))
    b = b.at[1, :hidden].set(params["b2"].reshape(-1))
    b = b.at[2, :h2].set(params["b3"].reshape(-1))
    b = b.at[3, :A].set(params["bp"].reshape(-1))
    b = b.at[3, A:A + 1].set(params["bv"].reshape(-1))

    w1, w2, w3, wh, b = jax.block_until_ready((w1, w2, w3, wh, b))
    return PreparedParams(w1=w1, w2=w2, w3=w3, wh=wh, b=b,
                          state_dim=state_dim, hidden=hidden, h2=h2, action_dim=A,
                          Hp=Hp, H2p=H2p, Op=Op, Dmax=Dmax)


# --------------------------------------------------------------------------
# Cached pallas_call builder (one trace / lowering per static configuration)
# --------------------------------------------------------------------------
@functools.lru_cache(maxsize=None)
def _build_forward(S, Hp, H2p, Op, Dmax, Bt, n_steps, out_dtype_name,
                   single_buffer, flops, bytes_accessed, vmem_limit):
    out_dtype = jnp.dtype(out_dtype_name)
    Bp = Bt * n_steps
    kernel = _make_kernel(Hp, H2p, Op)
    # Resident operands: constant index_map -> single-buffer to halve their VMEM.
    resident_kw = {"pipeline_mode": pl.Buffered(1)} if single_buffer else {}

    return pl.pallas_call(
        kernel,
        out_shape=jax.ShapeDtypeStruct((Bp, Op), out_dtype),
        grid=(n_steps,),
        in_specs=[
            pl.BlockSpec((Bt, S), lambda i: (i, 0)),                 # batch-tiled
            pl.BlockSpec((S, Hp), lambda i: (0, 0), **resident_kw),  # resident
            pl.BlockSpec((Hp, Hp), lambda i: (0, 0), **resident_kw),
            pl.BlockSpec((Hp, H2p), lambda i: (0, 0), **resident_kw),
            pl.BlockSpec((H2p, Op), lambda i: (0, 0), **resident_kw),
            pl.BlockSpec((8, Dmax), lambda i: (0, 0), **resident_kw),
        ],
        out_specs=pl.BlockSpec((Bt, Op), lambda i: (i, 0)),
        compiler_params=pltpu.CompilerParams(
            dimension_semantics=("parallel",),        # batch axis shards across TCs
            vmem_limit_bytes=vmem_limit,
        ),
        cost_estimate=pl.CostEstimate(
            flops=flops, transcendentals=0, bytes_accessed=bytes_accessed),
    )


# --------------------------------------------------------------------------
# Forward pass
# --------------------------------------------------------------------------
def policy_network_forward(state, prep: PreparedParams, *, batch_tile=1024,
                           out_dtype=jnp.float32):
    """state: (B, state_dim) f32.  Returns (action_logits (B, A), state_value (B, 1))."""
    B, S = state.shape
    assert S == prep.state_dim, "state_dim mismatch with prepared params"
    state = state.astype(f32)

    Hp, H2p, Op, Dmax = prep.Hp, prep.H2p, prep.Op, prep.Dmax
    A = prep.action_dim

    # Balanced batch tiling: shrink the tile so it evenly covers the batch
    # (padding capped at 7 rows) instead of padding Bp up to a fixed tile.
    Bp0 = _round_up(B, 8)
    n_steps = max(1, _cdiv(Bp0, batch_tile))
    # >= 2 grid steps when the batch is big enough, so v7x's 2nd TC gets work.
    if Bp0 >= 16 and n_steps < 2:
        n_steps = 2
    Bt = _round_up(_cdiv(Bp0, n_steps), 8)
    Bp = _round_up(Bp0, Bt)
    n_steps = Bp // Bt

    # No feature padding of x; only (small) batch padding when needed.
    x = state if Bp == B else jnp.zeros((Bp, S), f32).at[:B].set(state)

    # Cost estimate from the REAL (unpadded) dims.
    w_itemsize = prep.w1.dtype.itemsize
    out_itemsize = jnp.dtype(out_dtype).itemsize
    real_w = (prep.state_dim * prep.hidden + prep.hidden * prep.hidden
              + prep.hidden * prep.h2 + prep.h2 * (A + 1))
    flops = 2 * B * real_w
    bytes_accessed = (B * S * 4 + w_itemsize * real_w
                      + 4 * (2 * prep.hidden + prep.h2 + A + 1)
                      + B * (A + 1) * out_itemsize)

    def run(single_buffer):
        w_bufs = 1 if single_buffer else 2
        w_bytes = sum(int(a.size) * a.dtype.itemsize
                      for a in (prep.w1, prep.w2, prep.w3, prep.wh, prep.b))
        vmem_est = (w_bufs * w_bytes
                    + 2 * (Bt * S * 4 + Bt * Op * out_itemsize)   # x/out double buffers
                    + 4 * Bt * max(Hp, H2p, Op) * 4)              # f32 intermediates
        vmem_limit = int(min(64 * 1024 * 1024,
                             max(2 * vmem_est + (2 << 20), 16 << 20)))
        call = _build_forward(S, Hp, H2p, Op, Dmax, Bt, n_steps,
                              jnp.dtype(out_dtype).name, single_buffer,
                              flops, bytes_accessed, vmem_limit)
        return call(x, prep.w1, prep.w2, prep.w3, prep.wh, prep.b)

    global _SINGLE_BUFFER_OK
    if _SINGLE_BUFFER_OK is None:
        try:
            out = run(True)
            _SINGLE_BUFFER_OK = True
        except Exception:   # pl.Buffered(1) unsupported -> default double-buffering
            _SINGLE_BUFFER_OK = False
            out = run(False)
    else:
        out = run(_SINGLE_BUFFER_OK)

    logits = out[:B, :A].astype(f32)
    value = out[:B, A:A + 1].astype(f32)
    return logits, value


# --------------------------------------------------------------------------
# Reference / init / test
# --------------------------------------------------------------------------
def init_params(key, state_dim, max_action_dim, hidden_dim):
    """Deterministic init (shapes match the PyTorch module; values synthetic)."""
    h2 = hidden_dim // 2
    keys = jax.random.split(key, 10)

    def lin(kw, kb, fan_in, fan_out):
        scale = 1.0 / jnp.sqrt(fan_in)
        w = jax.random.uniform(kw, (fan_in, fan_out), jnp.float32, -scale, scale)
        b = jax.random.uniform(kb, (1, fan_out), jnp.float32, -scale, scale)
        return w, b

    w1, b1 = lin(keys[0], keys[1], state_dim, hidden_dim)
    w2, b2 = lin(keys[2], keys[3], hidden_dim, hidden_dim)
    w3, b3 = lin(keys[4], keys[5], hidden_dim, h2)
    wp, bp = lin(keys[6], keys[7], h2, max_action_dim)
    wv, bv = lin(keys[8], keys[9], h2, 1)
    return dict(w1=w1, b1=b1, w2=w2, b2=b2, w3=w3, b3=b3,
                wp=wp, bp=bp, wv=wv, bv=bv)


def reference_forward(state, p):
    h = jnp.maximum(state @ p["w1"] + p["b1"], 0.0)
    h = jnp.maximum(h @ p["w2"] + p["b2"], 0.0)
    h = jnp.maximum(h @ p["w3"] + p["b3"], 0.0)
    return h @ p["wp"] + p["bp"], h @ p["wv"] + p["bv"]


if __name__ == "__main__":
    batch = 2
    state_dim = 16
    max_action_dim = 8
    hidden_dim = 32

    key = jax.random.PRNGKey(0)
    k_state, k_params = jax.random.split(key)
    state = jax.random.normal(k_state, (batch, state_dim), jnp.float32)
    params = init_params(k_params, state_dim, max_action_dim, hidden_dim)

    ref_logits, ref_value = reference_forward(state, params)

    # f32 MXU path: matches the reference tightly (PyTorch semantics).
    prep_f32 = prepare_params(params, use_bf16=False)
    logits, value = policy_network_forward(state, prep_f32)
    logits, value = jax.block_until_ready((logits, value))
    assert logits.shape == (batch, max_action_dim)
    assert value.shape == (batch, 1)
    assert jnp.allclose(logits, ref_logits, atol=1e-5, rtol=1e-5)
    assert jnp.allclose(value, ref_value, atol=1e-5, rtol=1e-5)

    # bf16 MXU operands (recommended default on v6e/v7x): f32 accumulate,
    # looser tolerance from bf16 activation rounding across 4 matmuls.
    prep_bf16 = prepare_params(params, use_bf16=True)
    logits_bf, value_bf = policy_network_forward(state, prep_bf16)
    logits_bf, value_bf = jax.block_until_ready((logits_bf, value_bf))
    assert jnp.allclose(logits_bf, ref_logits, atol=5e-2, rtol=5e-2)
    assert jnp.allclose(value_bf, ref_value, atol=5e-2, rtol=5e-2)

    print("KERNEL_OK")
</pallas_src>

<mosaic_0001>
module attributes {stable_mosaic.version = 11 : i64} {
  func.func @kernel(%arg0: i32, %arg1: memref<8x16xf32, #tpu.memory_space<vmem>>, %arg2: memref<16x128xf32, #tpu.memory_space<vmem>>, %arg3: memref<128x128xf32, #tpu.memory_space<vmem>>, %arg4: memref<128x128xf32, #tpu.memory_space<vmem>>, %arg5: memref<128x128xf32, #tpu.memory_space<vmem>>, %arg6: memref<8x128xf32, #tpu.memory_space<vmem>>, %arg7: memref<8x128xf32, #tpu.memory_space<vmem>>) attributes {dimension_semantics = [#tpu.dimension_semantics<parallel>], iteration_bounds = array<i64: 1>, scalar_prefetch = 0 : i64, scratch_operands = 0 : i64, tpu.core_type = #tpu.core_type<tc>, window_params = [{transform_indices = @transform_0, window_bounds = array<i64: 8, 16>}, {pipeline_mode = #tpu.pipeline_mode<synchronous>, transform_indices = @transform_1, window_bounds = array<i64: 16, 128>}, {pipeline_mode = #tpu.pipeline_mode<synchronous>, transform_indices = @transform_2, window_bounds = array<i64: 128, 128>}, {pipeline_mode = #tpu.pipeline_mode<synchronous>, transform_indices = @transform_3, window_bounds = array<i64: 128, 128>}, {pipeline_mode = #tpu.pipeline_mode<synchronous>, transform_indices = @transform_4, window_bounds = array<i64: 128, 128>}, {pipeline_mode = #tpu.pipeline_mode<synchronous>, transform_indices = @transform_5, window_bounds = array<i64: 8, 128>}, {transform_indices = @transform_6, window_bounds = array<i64: 8, 128>}]} {
    %c0 = arith.constant 0 : index
    %c0_0 = arith.constant 0 : index
    %0 = vector.load %arg6[%c0, %c0_0] : memref<8x128xf32, #tpu.memory_space<vmem>>, vector<1x128xf32>
    %c1 = arith.constant 1 : index
    %c0_1 = arith.constant 0 : index
    %1 = vector.load %arg6[%c1, %c0_1] : memref<8x128xf32, #tpu.memory_space<vmem>>, vector<1x128xf32>
    %c2 = arith.constant 2 : index
    %c0_2 = arith.constant 0 : index
    %2 = vector.load %arg6[%c2, %c0_2] : memref<8x128xf32, #tpu.memory_space<vmem>>, vector<1x128xf32>
    %c3 = arith.constant 3 : index
    %c0_3 = arith.constant 0 : index
    %3 = vector.load %arg6[%c3, %c0_3] : memref<8x128xf32, #tpu.memory_space<vmem>>, vector<1x128xf32>
    %c0_4 = arith.constant 0 : index
    %c0_5 = arith.constant 0 : index
    %4 = vector.load %arg1[%c0_4, %c0_5] : memref<8x16xf32, #tpu.memory_space<vmem>>, vector<8x16xf32>
    %c0_6 = arith.constant 0 : index
    %c0_7 = arith.constant 0 : index
    %5 = vector.load %arg2[%c0_6, %c0_7] : memref<16x128xf32, #tpu.memory_space<vmem>>, vector<16x128xf32>
    %cst = arith.constant dense<0.000000e+00> : vector<8x128xf32>
    %6 = tpu.matmul %4, %5, %cst {dimension_numbers = #tpu.dot_dimension_numbers<[1], [0], [0], [1], [0, 0, 1, 1], [], []>} : vector<8x16xf32>, vector<16x128xf32>, vector<8x128xf32> -> vector<8x128xf32>
    %7 = vector.broadcast %0 : vector<1x128xf32> to vector<8x128xf32>
    %8 = arith.addf %6, %7 : vector<8x128xf32>
    %cst_8 = arith.constant 0.000000e+00 : f32
    %9 = vector.broadcast %cst_8 : f32 to vector<8x128xf32>
    %10 = arith.maximumf %8, %9 : vector<8x128xf32>
    %c0_9 = arith.constant 0 : index
    %c0_10 = arith.constant 0 : index
    %11 = vector.load %arg3[%c0_9, %c0_10] : memref<128x128xf32, #tpu.memory_space<vmem>>, vector<128x128xf32>
    %cst_11 = arith.constant dense<0.000000e+00> : vector<8x128xf32>
    %12 = tpu.matmul %10, %11, %cst_11 {dimension_numbers = #tpu.dot_dimension_numbers<[1], [0], [0], [1], [0, 0, 1, 1], [], []>} : vector<8x128xf32>, vector<128x128xf32>, vector<8x128xf32> -> vector<8x128xf32>
    %13 = vector.broadcast %1 : vector<1x128xf32> to vector<8x128xf32>
    %14 = arith.addf %12, %13 : vector<8x128xf32>
    %cst_12 = arith.constant 0.000000e+00 : f32
    %15 = vector.broadcast %cst_12 : f32 to vector<8x128xf32>
    %16 = arith.maximumf %14, %15 : vector<8x128xf32>
    %c0_13 = arith.constant 0 : index
    %c0_14 = arith.constant 0 : index
    %17 = vector.load %arg4[%c0_13, %c0_14] : memref<128x128xf32, #tpu.memory_space<vmem>>, vector<128x128xf32>
    %cst_15 = arith.constant dense<0.000000e+00> : vector<8x128xf32>
    %18 = tpu.matmul %16, %17, %cst_15 {dimension_numbers = #tpu.dot_dimension_numbers<[1], [0], [0], [1], [0, 0, 1, 1], [], []>} : vector<8x128xf32>, vector<128x128xf32>, vector<8x128xf32> -> vector<8x128xf32>
    %19 = vector.broadcast %2 : vector<1x128xf32> to vector<8x128xf32>
    %20 = arith.addf %18, %19 : vector<8x128xf32>
    %cst_16 = arith.constant 0.000000e+00 : f32
    %21 = vector.broadcast %cst_16 : f32 to vector<8x128xf32>
    %22 = arith.maximumf %20, %21 : vector<8x128xf32>
    %c0_17 = arith.constant 0 : index
    %c0_18 = arith.constant 0 : index
    %23 = vector.load %arg5[%c0_17, %c0_18] : memref<128x128xf32, #tpu.memory_space<vmem>>, vector<128x128xf32>
    %cst_19 = arith.constant dense<0.000000e+00> : vector<8x128xf32>
    %24 = tpu.matmul %22, %23, %cst_19 {dimension_numbers = #tpu.dot_dimension_numbers<[1], [0], [0], [1], [0, 0, 1, 1], [], []>} : vector<8x128xf32>, vector<128x128xf32>, vector<8x128xf32> -> vector<8x128xf32>
    %25 = vector.broadcast %3 : vector<1x128xf32> to vector<8x128xf32>
    %26 = arith.addf %24, %25 : vector<8x128xf32>
    %c0_20 = arith.constant 0 : index
    %c0_21 = arith.constant 0 : index
    %27 = vector.load %arg7[%c0_20, %c0_21] : memref<8x128xf32, #tpu.memory_space<vmem>>, vector<8x128xf32>
    tpu.vector_store %arg7[%c0_20, %c0_21], %26 {strides = array<i32>} : memref<8x128xf32, #tpu.memory_space<vmem>>, vector<8x128xf32>,
    return
  }
  func.func @transform_0(%arg0: i32) -> (i32, i32) {
    %c0_i32 = arith.constant 0 : i32
    %c0_i32_0 = arith.constant 0 : i32
    return %arg0, %c0_i32 : i32, i32
  }
  func.func @transform_1(%arg0: i32) -> (i32, i32) {
    %c0_i32 = arith.constant 0 : i32
    %c0_i32_0 = arith.constant 0 : i32
    %c0_i32_1 = arith.constant 0 : i32
    return %c0_i32, %c0_i32_0 : i32, i32
  }
  func.func @transform_2(%arg0: i32) -> (i32, i32) {
    %c0_i32 = arith.constant 0 : i32
    %c0_i32_0 = arith.constant 0 : i32
    %c0_i32_1 = arith.constant 0 : i32
    return %c0_i32, %c0_i32_0 : i32, i32
  }
  func.func @transform_3(%arg0: i32) -> (i32, i32) {
    %c0_i32 = arith.constant 0 : i32
    %c0_i32_0 = arith.constant 0 : i32
    %c0_i32_1 = arith.constant 0 : i32
    return %c0_i32, %c0_i32_0 : i32, i32
  }
  func.func @transform_4(%arg0: i32) -> (i32, i32) {
    %c0_i32 = arith.constant 0 : i32
    %c0_i32_0 = arith.constant 0 : i32
    %c0_i32_1 = arith.constant 0 : i32
    return %c0_i32, %c0_i32_0 : i32, i32
  }
  func.func @transform_5(%arg0: i32) -> (i32, i32) {
    %c0_i32 = arith.constant 0 : i32
    %c0_i32_0 = arith.constant 0 : i32
    %c0_i32_1 = arith.constant 0 : i32
    return %c0_i32, %c0_i32_0 : i32, i32
  }
  func.func @transform_6(%arg0: i32) -> (i32, i32) {
    %c0_i32 = arith.constant 0 : i32
    %c0_i32_0 = arith.constant 0 : i32
    return %arg0, %c0_i32 : i32, i32
  }
}

module attributes {stable_mosaic.version = 11 : i64} {
  func.func @kernel(%arg0: i32, %arg1: memref<8x16xf32, #tpu.memory_space<vmem>>, %arg2: memref<16x128xf32, #tpu.memory_space<vmem>>, %arg3: memref<128x128xf32, #tpu.memory_space<vmem>>, %arg4: memref<128x128xf32, #tpu.memory_space<vmem>>, %arg5: memref<128x128xf32, #tpu.memory_space<vmem>>, %arg6: memref<8x128xf32, #tpu.memory_space<vmem>>, %arg7: memref<8x128xf32, #tpu.memory_space<vmem>>) attributes {dimension_semantics = [#tpu.dimension_semantics<parallel>], iteration_bounds = array<i64: 1>, scalar_prefetch = 0 : i64, scratch_operands = 0 : i64, tpu.core_type = #tpu.core_type<tc>, window_params = [{transform_indices = @transform_0, window_bounds = array<i64: 8, 16>}, {pipeline_mode = #tpu.pipeline_mode<synchronous>, transform_indices = @transform_1, window_bounds = array<i64: 16, 128>}, {pipeline_mode = #tpu.pipeline_mode<synchronous>, transform_indices = @transform_2, window_bounds = array<i64: 128, 128>}, {pipeline_mode = #tpu.pipeline_mode<synchronous>, transform_indices = @transform_3, window_bounds = array<i64: 128, 128>}, {pipeline_mode = #tpu.pipeline_mode<synchronous>, transform_indices = @transform_4, window_bounds = array<i64: 128, 128>}, {pipeline_mode = #tpu.pipeline_mode<synchronous>, transform_indices = @transform_5, window_bounds = array<i64: 8, 128>}, {transform_indices = @transform_6, window_bounds = array<i64: 8, 128>}]} {
    %c0 = arith.constant 0 : index
    %c0_0 = arith.constant 0 : index
    %0 = vector.load %arg6[%c0, %c0_0] : memref<8x128xf32, #tpu.memory_space<vmem>>, vector<1x128xf32>
    %c1 = arith.constant 1 : index
    %c0_1 = arith.constant 0 : index
    %1 = vector.load %arg6[%c1, %c0_1] : memref<8x128xf32, #tpu.memory_space<vmem>>, vector<1x128xf32>
    %c2 = arith.constant 2 : index
    %c0_2 = arith.constant 0 : index
    %2 = vector.load %arg6[%c2, %c0_2] : memref<8x128xf32, #tpu.memory_space<vmem>>, vector<1x128xf32>
    %c3 = arith.constant 3 : index
    %c0_3 = arith.constant 0 : index
    %3 = vector.load %arg6[%c3, %c0_3] : memref<8x128xf32, #tpu.memory_space<vmem>>, vector<1x128xf32>
    %c0_4 = arith.constant 0 : index
    %c0_5 = arith.constant 0 : index
    %4 = vector.load %arg1[%c0_4, %c0_5] : memref<8x16xf32, #tpu.memory_space<vmem>>, vector<8x16xf32>
    %c0_6 = arith.constant 0 : index
    %c0_7 = arith.constant 0 : index
    %5 = vector.load %arg2[%c0_6, %c0_7] : memref<16x128xf32, #tpu.memory_space<vmem>>, vector<16x128xf32>
    %cst = arith.constant dense<0.000000e+00> : vector<8x128xf32>
    %6 = tpu.matmul %4, %5, %cst {dimension_numbers = #tpu.dot_dimension_numbers<[1], [0], [0], [1], [0, 0, 1, 1], [], []>} : vector<8x16xf32>, vector<16x128xf32>, vector<8x128xf32> -> vector<8x128xf32>
    %7 = vector.broadcast %0 : vector<1x128xf32> to vector<8x128xf32>
    %8 = arith.addf %6, %7 : vector<8x128xf32>
    %cst_8 = arith.constant 0.000000e+00 : f32
    %9 = vector.broadcast %cst_8 : f32 to vector<8x128xf32>
    %10 = arith.maximumf %8, %9 : vector<8x128xf32>
    %c0_9 = arith.constant 0 : index
    %c0_10 = arith.constant 0 : index
    %11 = vector.load %arg3[%c0_9, %c0_10] : memref<128x128xf32, #tpu.memory_space<vmem>>, vector<128x128xf32>
    %cst_11 = arith.constant dense<0.000000e+00> : vector<8x128xf32>
    %12 = tpu.matmul %10, %11, %cst_11 {dimension_numbers = #tpu.dot_dimension_numbers<[1], [0], [0], [1], [0, 0, 1, 1], [], []>} : vector<8x128xf32>, vector<128x128xf32>, vector<8x128xf32> -> vector<8x128xf32>
    %13 = vector.broadcast %1 : vector<1x128xf32> to vector<8x128xf32>
    %14 = arith.addf %12, %13 : vector<8x128xf32>
    %cst_12 = arith.constant 0.000000e+00 : f32
    %15 = vector.broadcast %cst_12 : f32 to vector<8x128xf32>
    %16 = arith.maximumf %14, %15 : vector<8x128xf32>
    %c0_13 = arith.constant 0 : index
    %c0_14 = arith.constant 0 : index
    %17 = vector.load %arg4[%c0_13, %c0_14] : memref<128x128xf32, #tpu.memory_space<vmem>>, vector<128x128xf32>
    %cst_15 = arith.constant dense<0.000000e+00> : vector<8x128xf32>
    %18 = tpu.matmul %16, %17, %cst_15 {dimension_numbers = #tpu.dot_dimension_numbers<[1], [0], [0], [1], [0, 0, 1, 1], [], []>} : vector<8x128xf32>, vector<128x128xf32>, vector<8x128xf32> -> vector<8x128xf32>
    %19 = vector.broadcast %2 : vector<1x128xf32> to vector<8x128xf32>
    %20 = arith.addf %18, %19 : vector<8x128xf32>
    %cst_16 = arith.constant 0.000000e+00 : f32
    %21 = vector.broadcast %cst_16 : f32 to vector<8x128xf32>
    %22 = arith.maximumf %20, %21 : vector<8x128xf32>
    %c0_17 = arith.constant 0 : index
    %c0_18 = arith.constant 0 : index
    %23 = vector.load %arg5[%c0_17, %c0_18] : memref<128x128xf32, #tpu.memory_space<vmem>>, vector<128x128xf32>
    %cst_19 = arith.constant dense<0.000000e+00> : vector<8x128xf32>
    %24 = tpu.matmul %22, %23, %cst_19 {dimension_numbers = #tpu.dot_dimension_numbers<[1], [0], [0], [1], [0, 0, 1, 1], [], []>} : vector<8x128xf32>, vector<128x128xf32>, vector<8x128xf32> -> vector<8x128xf32>
    %25 = vector.broadcast %3 : vector<1x128xf32> to vector<8x128xf32>
    %26 = arith.addf %24, %25 : vector<8x128xf32>
    %c0_20 = arith.constant 0 : index
    %c0_21 = arith.constant 0 : index
    %27 = vector.load %arg7[%c0_20, %c0_21] : memref<8x128xf32, #tpu.memory_space<vmem>>, vector<8x128xf32>
    tpu.vector_store %arg7[%c0_20, %c0_21], %26 {strides = array<i32>} : memref<8x128xf32, #tpu.memory_space<vmem>>, vector<8x128xf32>,
    return
  }
  func.func @transform_0(%arg0: i32) -> (i32, i32) {
    %c0_i32 = arith.constant 0 : i32
    %c0_i32_0 = arith.constant 0 : i32
    return %arg0, %c0_i32 : i32, i32
  }
  func.func @transform_1(%arg0: i32) -> (i32, i32) {
    %c0_i32 = arith.constant 0 : i32
    %c0_i32_0 = arith.constant 0 : i32
    %c0_i32_1 = arith.constant 0 : i32
    return %c0_i32, %c0_i32_0 : i32, i32
  }
  func.func @transform_2(%arg0: i32) -> (i32, i32) {
    %c0_i32 = arith.constant 0 : i32
    %c0_i32_0 = arith.constant 0 : i32
    %c0_i32_1 = arith.constant 0 : i32
    return %c0_i32, %c0_i32_0 : i32, i32
  }
  func.func @transform_3(%arg0: i32) -> (i32, i32) {
    %c0_i32 = arith.constant 0 : i32
    %c0_i32_0 = arith.constant 0 : i32
    %c0_i32_1 = arith.constant 0 : i32
    return %c0_i32, %c0_i32_0 : i32, i32
  }
  func.func @transform_4(%arg0: i32) -> (i32, i32) {
    %c0_i32 = arith.constant 0 : i32
    %c0_i32_0 = arith.constant 0 : i32
    %c0_i32_1 = arith.constant 0 : i32
    return %c0_i32, %c0_i32_0 : i32, i32
  }
  func.func @transform_5(%arg0: i32) -> (i32, i32) {
    %c0_i32 = arith.constant 0 : i32
    %c0_i32_0 = arith.constant 0 : i32
    %c0_i32_1 = arith.constant 0 : i32
    return %c0_i32, %c0_i32_0 : i32, i32
  }
  func.func @transform_6(%arg0: i32) -> (i32, i32) {
    %c0_i32 = arith.constant 0 : i32
    %c0_i32_0 = arith.constant 0 : i32
    return %arg0, %c0_i32 : i32, i32
  }
}

</mosaic_0001>

<llo_original>
// kernel: tpu_custom_call.1
$region0: #{tpu_custom_call.1}
  #allocation0 [shape = 'u32[]', space=smem, size = 0x4, offset = 0x4, fixed_abs, tag = 'smem constant byte address 0x4 - core index']
  #allocation1 [shape = 'u32[72,128]{1,0:T(1,128)}', space=vmem, size = 0x9000, scoped, tag = 'internal scratch']
  %s0 = inlined_call_operand.hbm [shape: f32[8,16], index: 0, kind: input, shape index: {}]
  %s1 = inlined_call_operand.hbm [shape: f32[16,128], index: 1, kind: input, shape index: {}]
  %s2 = inlined_call_operand.hbm [shape: f32[128,128], index: 2, kind: input, shape index: {}]
  %s3 = inlined_call_operand.hbm [shape: f32[128,128], index: 3, kind: input, shape index: {}]
  %s4 = inlined_call_operand.hbm [shape: f32[128,128], index: 4, kind: input, shape index: {}]
  %s5 = inlined_call_operand.hbm [shape: f32[8,128], index: 5, kind: input, shape index: {}]
  %s6 = inlined_call_operand.hbm [shape: f32[8,128], index: 6, kind: output, shape index: {}]
  %s7 = sld [smem:[#allocation0]]
  $region58: #{tpu_custom_call.1} parent=0
    _
  %s9 = ssub.s32 1, %s7
  %s10 = scalar_select 0, %s9, %s7
  $region1: #{tpu_custom_call.1} parent=0
    #allocation2 [shape = 'u8[4096]{0}', space=vmem, size = 0x1000, scoped, tag = 'input window, operand 0, single buffered']
    #allocation3 [shape = 's32[1]{0}', space=sflag, size = 0x4, scoped, tag = 'scoped memory for tpu_custom_call.1']
    #allocation4 [shape = 's32[1]{0}', space=sflag, size = 0x4, scoped, tag = 'scoped memory for tpu_custom_call.1']
    #allocation5 [shape = 'u8[8192]{0}', space=vmem, size = 0x2000, scoped, tag = 'input window, operand 1, single buffered']
    #allocation6 [shape = 's32[1]{0}', space=sflag, size = 0x4, scoped, tag = 'scoped memory for tpu_custom_call.1']
    #allocation7 [shape = 'u8[65536]{0}', space=vmem, size = 0x10000, scoped, tag = 'input window, operand 2, single buffered']
    #allocation8 [shape = 'u8[65536]{0}', space=vmem, size = 0x10000, scoped, tag = 'input window, operand 3, single buffered']
    #allocation9 [shape = 's32[1]{0}', space=sflag, size = 0x4, scoped, tag = 'scoped memory for tpu_custom_call.1']
    #allocation10 [shape = 'u8[65536]{0}', space=vmem, size = 0x10000, scoped, tag = 'input window, operand 4, single buffered']
    #allocation11 [shape = 'u8[4096]{0}', space=vmem, size = 0x1000, scoped, tag = 'input window, operand 5, single buffered']
    #allocation12 [shape = 's32[1]{0}', space=sflag, size = 0x4, scoped, tag = 'scoped memory for tpu_custom_call.1']
    #allocation13 [shape = 'u8[4096]{0}', space=vmem, size = 0x1000, scoped, tag = 'output window, operand 0, single buffered']
    %11 = vsyncpa [#allocation3], 0
    %12 = vsyncpa [#allocation6], 0
    %13 = vsyncpa [#allocation9], 0
    %14 = vsyncpa [#allocation12], 0
    %15 = vsyncpa [#allocation4], 0
    // Predicated region
    $region2: #{tpu_custom_call.1} parent=1 // pred_check
      _
    $region3: #{tpu_custom_call.1} parent=1 // pred_check_branch
      %17 = sbr.rel (0) target = $region5
    $region4: #{tpu_custom_call.1} parent=1 // pred_region
      %19 = vsyncadd [#allocation3], 0
      %s21 = sshll.u32 %s0, 4
      %s22 = int_to_ptr.hbm [resolvable:$true] %s21
      %s23 = sshll.u32 [#allocation2], 4
      %s24 = int_to_ptr.vmem [resolvable:$true] %s23
      %26 = dma.hbm_to_vmem [thread:$0]  %s22, 128, %s24, [#allocation3]
    $region5: #{tpu_custom_call.1} parent=1 // pred_fallthru
      _
    // Predicated region
    $region6: #{tpu_custom_call.1} parent=1 // pred_check
      _
    $region7: #{tpu_custom_call.1} parent=1 // pred_check_branch
      %28 = sbr.rel (0) target = $region9
    $region8: #{tpu_custom_call.1} parent=1 // pred_region
      %30 = vsyncadd [#allocation6], 0
      %s31 = sshll.u32 %s1, 4
      %s32 = int_to_ptr.hbm [resolvable:$true] %s31
      %s33 = sshll.u32 [#allocation5], 4
      %s34 = int_to_ptr.vmem [resolvable:$true] %s33
      %39 = dma.hbm_to_vmem [thread:$0]  %s32, 256, %s34, [#allocation6], 128, 128, 8
    $region9: #{tpu_custom_call.1} parent=1 // pred_fallthru
      _
    // Predicated region
    $region10: #{tpu_custom_call.1} parent=1 // pred_check
      _
    $region11: #{tpu_custom_call.1} parent=1 // pred_check_branch
      %41 = sbr.rel (0) target = $region13
    $region12: #{tpu_custom_call.1} parent=1 // pred_region
      %43 = vsyncadd [#allocation6], 0
      %s44 = sshll.u32 %s2, 4
      %s45 = int_to_ptr.hbm [resolvable:$true] %s44
      %s46 = sshll.u32 [#allocation7], 4
      %s47 = int_to_ptr.vmem [resolvable:$true] %s46
      %52 = dma.hbm_to_vmem [thread:$0]  %s45, 2048, %s47, [#allocation6], 128, 128, 8
    $region13: #{tpu_custom_call.1} parent=1 // pred_fallthru
      _
    // Predicated region
    $region14: #{tpu_custom_call.1} parent=1 // pred_check
      _
    $region15: #{tpu_custom_call.1} parent=1 // pred_check_branch
      %54 = sbr.rel (0) target = $region17
    $region16: #{tpu_custom_call.1} parent=1 // pred_region
      %56 = vsyncadd [#allocation9], 0
      %s57 = sshll.u32 %s3, 4
      %s58 = int_to_ptr.hbm [resolvable:$true] %s57
      %s59 = sshll.u32 [#allocation8], 4
      %s60 = int_to_ptr.vmem [resolvable:$true] %s59
      %65 = dma.hbm_to_vmem [thread:$0]  %s58, 2048, %s60, [#allocation9], 128, 128, 8
    $region17: #{tpu_custom_call.1} parent=1 // pred_fallthru
      _
    // Predicated region
    $region18: #{tpu_custom_call.1} parent=1 // pred_check
      _
    $region19: #{tpu_custom_call.1} parent=1 // pred_check_branch
      %67 = sbr.rel (0) target = $region21
    $region20: #{tpu_custom_call.1} parent=1 // pred_region
      %69 = vsyncadd [#allocation9], 0
      %s70 = sshll.u32 %s4, 4
      %s71 = int_to_ptr.hbm [resolvable:$true] %s70
      %s72 = sshll.u32 [#allocation10], 4
      %s73 = int_to_ptr.vmem [resolvable:$true] %s72
      %78 = dma.hbm_to_vmem [thread:$0]  %s71, 2048, %s73, [#allocation9], 128, 128, 8
    $region21: #{tpu_custom_call.1} parent=1 // pred_fallthru
      _
    // Predicated region
    $region22: #{tpu_custom_call.1} parent=1 // pred_check
      _
    $region23: #{tpu_custom_call.1} parent=1 // pred_check_branch
      %80 = sbr.rel (0) target = $region25
    $region24: #{tpu_custom_call.1} parent=1 // pred_region
      %82 = vsyncadd [#allocation12], 0
      %s84 = sshll.u32 %s5, 4
      %s85 = int_to_ptr.hbm [resolvable:$true] %s84
      %s86 = sshll.u32 [#allocation11], 4
      %s87 = int_to_ptr.vmem [resolvable:$true] %s86
      %89 = dma.hbm_to_vmem [thread:$0]  %s85, 128, %s87, [#allocation12]
    $region25: #{tpu_custom_call.1} parent=1 // pred_fallthru
      _
    // Predicated region
    $region26: #{tpu_custom_call.1} parent=1 // pred_check
      _
    $region27: #{tpu_custom_call.1} parent=1 // pred_check_branch
      %91 = sbr.rel (0) target = $region29
    $region28: #{tpu_custom_call.1} parent=1 // pred_region
      %93 = dma.done [#allocation3], 128
    $region29: #{tpu_custom_call.1} parent=1 // pred_fallthru
      _
    // Predicated region
    $region30: #{tpu_custom_call.1} parent=1 // pred_check
      _
    $region31: #{tpu_custom_call.1} parent=1 // pred_check_branch
      %95 = sbr.rel (0) target = $region33
    $region32: #{tpu_custom_call.1} parent=1 // pred_region
      %97 = dma.done [#allocation6], 256
    $region33: #{tpu_custom_call.1} parent=1 // pred_fallthru
      _
    // Predicated region
    $region34: #{tpu_custom_call.1} parent=1 // pred_check
      _
    $region35: #{tpu_custom_call.1} parent=1 // pred_check_branch
      %99 = sbr.rel (0) target = $region37
    $region36: #{tpu_custom_call.1} parent=1 // pred_region
      %101 = dma.done [#allocation6], 2048
    $region37: #{tpu_custom_call.1} parent=1 // pred_fallthru
      _
    // Predicated region
    $region38: #{tpu_custom_call.1} parent=1 // pred_check
      _
    $region39: #{tpu_custom_call.1} parent=1 // pred_check_branch
      %103 = sbr.rel (0) target = $region41
    $region40: #{tpu_custom_call.1} parent=1 // pred_region
      %105 = dma.done [#allocation9], 2048
    $region41: #{tpu_custom_call.1} parent=1 // pred_fallthru
      _
    // Predicated region
    $region42: #{tpu_custom_call.1} parent=1 // pred_check
      _
    $region43: #{tpu_custom_call.1} parent=1 // pred_check_branch
      %107 = sbr.rel (0) target = $region45
    $region44: #{tpu_custom_call.1} parent=1 // pred_region
      %109 = dma.done [#allocation9], 2048
    $region45: #{tpu_custom_call.1} parent=1 // pred_fallthru
      _
    // Predicated region
    $region46: #{tpu_custom_call.1} parent=1 // pred_check
      _
    $region47: #{tpu_custom_call.1} parent=1 // pred_check_branch
      %111 = sbr.rel (0) target = $region49
    $region48: #{tpu_custom_call.1} parent=1 // pred_region
      %113 = dma.done [#allocation12], 128
    $region49: #{tpu_custom_call.1} parent=1 // pred_fallthru
      _
    %v114 = vld [vmem:[#allocation11] sm:$0x1]
    %v115 = vld [vmem:[#allocation11 + $0x1] sm:$0x1]
    %v116 = vld [vmem:[#allocation11 + $0x2] sm:$0x1]
    %v117 = vld [vmem:[#allocation11 + $0x3] sm:$0x1]
    %v118 = vld [vmem:[#allocation2] sm:$0xff]
    %v119 = vld [vmem:[#allocation5] sm:$0xff]
    %v120 = vld [vmem:[#allocation5 + $0x8] sm:$0xff]
    %v121 = vperm.slane %v114, 0
    %vm122 = vcmask 130048
    %v124 = vsel %vm122, %v118, 0
    %126 = vmatpush.msra.mxu0 0.0
    %127 = vmatpush.msra.mxu0 0.0
    %128 = vmatpush.msra.mxu0 0.0
    %129 = vmatpush.msra.mxu0 0.0
    %130 = vmatpush.msra.mxu0 0.0
    %131 = vmatpush.msra.mxu0 0.0
    %132 = vmatpush.msra.mxu0 0.0
    %133 = vmatpush.msra.mxu0 0.0
    %134 = vmatpush.msra.mxu0 0.0
    %135 = vmatpush.msra.mxu0 0.0
    %136 = vmatpush.msra.mxu0 0.0
    %137 = vmatpush.msra.mxu0 0.0
    %138 = vmatpush.msra.mxu0 0.0
    %139 = vmatpush.msra.mxu0 0.0
    %140 = vmatpush.msra.mxu0 %v120
    %141 = vmatpush.msra.mxu0 %v119
    %142 = vmatmul.f32.gmra.mxu0 %v124
    %v143 = vpop.f32.mrf.mxu0
    %v144 = vadd.f32 %v121, %v143
    %145 = vdwg.mxu0
    %v146 = vmax.f32 %v144, 0.0
    %v147 = vld [vmem:[#allocation7] sm:$0xff]
    %v148 = vld [vmem:[#allocation7 + $0x8] sm:$0xff]
    %v149 = vld [vmem:[#allocation7 + $0x10] sm:$0xff]
    %v150 = vld [vmem:[#allocation7 + $0x18] sm:$0xff]
    %v151 = vld [vmem:[#allocation7 + $0x20] sm:$0xff]
    %v152 = vld [vmem:[#allocation7 + $0x28] sm:$0xff]
    %v153 = vld [vmem:[#allocation7 + $0x30] sm:$0xff]
    %v154 = vld [vmem:[#allocation7 + $0x38] sm:$0xff]
    %v155 = vld [vmem:[#allocation7 + $0x40] sm:$0xff]
    %v156 = vld [vmem:[#allocation7 + $0x48] sm:$0xff]
    %v157 = vld [vmem:[#allocation7 + $0x50] sm:$0xff]
    %v158 = vld [vmem:[#allocation7 + $0x58] sm:$0xff]
    %v159 = vld [vmem:[#allocation7 + $0x60] sm:$0xff]
    %v160 = vld [vmem:[#allocation7 + $0x68] sm:$0xff]
    %v161 = vld [vmem:[#allocation7 + $0x70] sm:$0xff]
    %v162 = vld [vmem:[#allocation7 + $0x78] sm:$0xff]
    %v163 = vperm.slane %v115, 0
    %164 = vmatpush.msra.mxu0 %v162
    %165 = vmatpush.msra.mxu0 %v161
    %166 = vmatpush.msra.mxu0 %v160
    %167 = vmatpush.msra.mxu0 %v159
    %168 = vmatpush.msra.mxu0 %v158
    %169 = vmatpush.msra.mxu0 %v157
    %170 = vmatpush.msra.mxu0 %v156
    %171 = vmatpush.msra.mxu0 %v155
    %172 = vmatpush.msra.mxu0 %v154
    %173 = vmatpush.msra.mxu0 %v153
    %174 = vmatpush.msra.mxu0 %v152
    %175 = vmatpush.msra.mxu0 %v151
    %176 = vmatpush.msra.mxu0 %v150
    %177 = vmatpush.msra.mxu0 %v149
    %178 = vmatpush.msra.mxu0 %v148
    %179 = vmatpush.msra.mxu0 %v147
    %180 = vmatmul.f32.gmra.mxu0 %v146
    %v181 = vpop.f32.mrf.mxu0
    %v182 = vadd.f32 %v163, %v181
    %183 = vdwg.mxu0
    %v184 = vmax.f32 %v182, 0.0
    %v185 = vld [vmem:[#allocation8] sm:$0xff]
    %v186 = vld [vmem:[#allocation8 + $0x8] sm:$0xff]
    %v187 = vld [vmem:[#allocation8 + $0x10] sm:$0xff]
    %v188 = vld [vmem:[#allocation8 + $0x18] sm:$0xff]
    %v189 = vld [vmem:[#allocation8 + $0x20] sm:$0xff]
    %v190 = vld [vmem:[#allocation8 + $0x28] sm:$0xff]
    %v191 = vld [vmem:[#allocation8 + $0x30] sm:$0xff]
    %v192 = vld [vmem:[#allocation8 + $0x38] sm:$0xff]
    %v193 = vld [vmem:[#allocation8 + $0x40] sm:$0xff]
    %v194 = vld [vmem:[#allocation8 + $0x48] sm:$0xff]
    %v195 = vld [vmem:[#allocation8 + $0x50] sm:$0xff]
    %v196 = vld [vmem:[#allocation8 + $0x58] sm:$0xff]
    %v197 = vld [vmem:[#allocation8 + $0x60] sm:$0xff]
    %v198 = vld [vmem:[#allocation8 + $0x68] sm:$0xff]
    %v199 = vld [vmem:[#allocation8 + $0x70] sm:$0xff]
    %v200 = vld [vmem:[#allocation8 + $0x78] sm:$0xff]
    %v201 = vperm.slane %v116, 0
    %202 = vmatpush.msra.mxu0 %v200
    %203 = vmatpush.msra.mxu0 %v199
    %204 = vmatpush.msra.mxu0 %v198
    %205 = vmatpush.msra.mxu0 %v197
    %206 = vmatpush.msra.mxu0 %v196
    %207 = vmatpush.msra.mxu0 %v195
    %208 = vmatpush.msra.mxu0 %v194
    %209 = vmatpush.msra.mxu0 %v193
    %210 = vmatpush.msra.mxu0 %v192
    %211 = vmatpush.msra.mxu0 %v191
    %212 = vmatpush.msra.mxu0 %v190
    %213 = vmatpush.msra.mxu0 %v189
    %214 = vmatpush.msra.mxu0 %v188
    %215 = vmatpush.msra.mxu0 %v187
    %216 = vmatpush.msra.mxu0 %v186
    %217 = vmatpush.msra.mxu0 %v185
    %218 = vmatmul.f32.gmra.mxu0 %v184
    %v219 = vpop.f32.mrf.mxu0
    %v220 = vadd.f32 %v201, %v219
    %221 = vdwg.mxu0
    %v222 = vmax.f32 %v220, 0.0
    %v223 = vld [vmem:[#allocation10] sm:$0xff]
    %v224 = vld [vmem:[#allocation10 + $0x8] sm:$0xff]
    %v225 = vld [vmem:[#allocation10 + $0x10] sm:$0xff]
    %v226 = vld [vmem:[#allocation10 + $0x18] sm:$0xff]
    %v227 = vld [vmem:[#allocation10 + $0x20] sm:$0xff]
    %v228 = vld [vmem:[#allocation10 + $0x28] sm:$0xff]
    %v229 = vld [vmem:[#allocation10 + $0x30] sm:$0xff]
    %v230 = vld [vmem:[#allocation10 + $0x38] sm:$0xff]
    %v231 = vld [vmem:[#allocation10 + $0x40] sm:$0xff]
    %v232 = vld [vmem:[#allocation10 + $0x48] sm:$0xff]
    %v233 = vld [vmem:[#allocation10 + $0x50] sm:$0xff]
    %v234 = vld [vmem:[#allocation10 + $0x58] sm:$0xff]
    %v235 = vld [vmem:[#allocation10 + $0x60] sm:$0xff]
    %v236 = vld [vmem:[#allocation10 + $0x68] sm:$0xff]
    %v237 = vld [vmem:[#allocation10 + $0x70] sm:$0xff]
    %v238 = vld [vmem:[#allocation10 + $0x78] sm:$0xff]
    %v239 = vperm.slane %v117, 0
    %240 = vmatpush.msra.mxu0 %v238
    %241 = vmatpush.msra.mxu0 %v237
    %242 = vmatpush.msra.mxu0 %v236
    %243 = vmatpush.msra.mxu0 %v235
    %244 = vmatpush.msra.mxu0 %v234
    %245 = vmatpush.msra.mxu0 %v233
    %246 = vmatpush.msra.mxu0 %v232
    %247 = vmatpush.msra.mxu0 %v231
    %248 = vmatpush.msra.mxu0 %v230
    %249 = vmatpush.msra.mxu0 %v229
    %250 = vmatpush.msra.mxu0 %v228
    %251 = vmatpush.msra.mxu0 %v227
    %252 = vmatpush.msra.mxu0 %v226
    %253 = vmatpush.msra.mxu0 %v225
    %254 = vmatpush.msra.mxu0 %v224
    %255 = vmatpush.msra.mxu0 %v223
    %256 = vmatmul.f32.gmra.mxu0 %v222
    %v257 = vpop.f32.mrf.mxu0
    %v258 = vadd.f32 %v239, %v257
    %259 = vdwg.mxu0
    %260 = vst [vmem:[#allocation13] sm:$0xff] %v258
    // Predicated region
    $region50: #{tpu_custom_call.1} parent=1 // pred_check
      _
    $region51: #{tpu_custom_call.1} parent=1 // pred_check_branch
      %262 = sbr.rel (0) target = $region53
    $region52: #{tpu_custom_call.1} parent=1 // pred_region
      %264 = vsyncadd [#allocation4], 0
      %s266 = sshll.u32 [#allocation13], 4
      %s267 = int_to_ptr.vmem [resolvable:$true] %s266
      %s268 = sshll.u32 %s6, 4
      %s269 = int_to_ptr.hbm [resolvable:$true] %s268
      %271 = dma.vmem_to_hbm [thread:$0]  %s267, 128, %s269, [#allocation4]
    $region53: #{tpu_custom_call.1} parent=1 // pred_fallthru
      _
    // Predicated region
    $region54: #{tpu_custom_call.1} parent=1 // pred_check
      _
    $region55: #{tpu_custom_call.1} parent=1 // pred_check_branch
      %273 = sbr.rel (0) target = $region57
    $region56: #{tpu_custom_call.1} parent=1 // pred_region
      %275 = dma.done [#allocation4], 128
    $region57: #{tpu_custom_call.1} parent=1 // pred_fallthru
      _
    %276 = vsyncpa [#allocation3], 1
    %277 = vsyncpa [#allocation6], 1
    %278 = vsyncpa [#allocation9], 1
    %279 = vsyncpa [#allocation12], 1
    %280 = vsyncpa [#allocation4], 1

// kernel: tpu_custom_call.1
$region0: #{tpu_custom_call.1}
  #allocation0 [shape = 'u32[]', space=smem, size = 0x4, offset = 0x4, fixed_abs, tag = 'smem constant byte address 0x4 - core index']
  #allocation1 [shape = 'u32[72,128]{1,0:T(1,128)}', space=vmem, size = 0x9000, scoped, tag = 'internal scratch']
  %s0 = inlined_call_operand.hbm [shape: f32[8,16], index: 0, kind: input, shape index: {}]
  %s1 = inlined_call_operand.hbm [shape: f32[16,128], index: 1, kind: input, shape index: {}]
  %s2 = inlined_call_operand.hbm [shape: f32[128,128], index: 2, kind: input, shape index: {}]
  %s3 = inlined_call_operand.hbm [shape: f32[128,128], index: 3, kind: input, shape index: {}]
  %s4 = inlined_call_operand.hbm [shape: f32[128,128], index: 4, kind: input, shape index: {}]
  %s5 = inlined_call_operand.hbm [shape: f32[8,128], index: 5, kind: input, shape index: {}]
  %s6 = inlined_call_operand.hbm [shape: f32[8,128], index: 6, kind: output, shape index: {}]
  %s7 = sld [smem:[#allocation0]]
  $region58: #{tpu_custom_call.1} parent=0
    _
  %s9 = ssub.s32 1, %s7
  %s10 = scalar_select 0, %s9, %s7
  $region1: #{tpu_custom_call.1} parent=0
    #allocation2 [shape = 'u8[4096]{0}', space=vmem, size = 0x1000, scoped, tag = 'input window, operand 0, single buffered']
    #allocation3 [shape = 's32[1]{0}', space=sflag, size = 0x4, scoped, tag = 'scoped memory for tpu_custom_call.1']
    #allocation4 [shape = 's32[1]{0}', space=sflag, size = 0x4, scoped, tag = 'scoped memory for tpu_custom_call.1']
    #allocation5 [shape = 'u8[8192]{0}', space=vmem, size = 0x2000, scoped, tag = 'input window, operand 1, single buffered']
    #allocation6 [shape = 's32[1]{0}', space=sflag, size = 0x4, scoped, tag = 'scoped memory for tpu_custom_call.1']
    #allocation7 [shape = 'u8[65536]{0}', space=vmem, size = 0x10000, scoped, tag = 'input window, operand 2, single buffered']
    #allocation8 [shape = 'u8[65536]{0}', space=vmem, size = 0x10000, scoped, tag = 'input window, operand 3, single buffered']
    #allocation9 [shape = 's32[1]{0}', space=sflag, size = 0x4, scoped, tag = 'scoped memory for tpu_custom_call.1']
    #allocation10 [shape = 'u8[65536]{0}', space=vmem, size = 0x10000, scoped, tag = 'input window, operand 4, single buffered']
    #allocation11 [shape = 'u8[4096]{0}', space=vmem, size = 0x1000, scoped, tag = 'input window, operand 5, single buffered']
    #allocation12 [shape = 's32[1]{0}', space=sflag, size = 0x4, scoped, tag = 'scoped memory for tpu_custom_call.1']
    #allocation13 [shape = 'u8[4096]{0}', space=vmem, size = 0x1000, scoped, tag = 'output window, operand 0, single buffered']
    %11 = vsyncpa [#allocation3], 0
    %12 = vsyncpa [#allocation6], 0
    %13 = vsyncpa [#allocation9], 0
    %14 = vsyncpa [#allocation12], 0
    %15 = vsyncpa [#allocation4], 0
    // Predicated region
    $region2: #{tpu_custom_call.1} parent=1 // pred_check
      _
    $region3: #{tpu_custom_call.1} parent=1 // pred_check_branch
      %17 = sbr.rel (0) target = $region5
    $region4: #{tpu_custom_call.1} parent=1 // pred_region
      %19 = vsyncadd [#allocation3], 0
      %s21 = sshll.u32 %s0, 4
      %s22 = int_to_ptr.hbm [resolvable:$true] %s21
      %s23 = sshll.u32 [#allocation2], 4
      %s24 = int_to_ptr.vmem [resolvable:$true] %s23
      %26 = dma.hbm_to_vmem [thread:$0]  %s22, 128, %s24, [#allocation3]
    $region5: #{tpu_custom_call.1} parent=1 // pred_fallthru
      _
    // Predicated region
    $region6: #{tpu_custom_call.1} parent=1 // pred_check
      _
    $region7: #{tpu_custom_call.1} parent=1 // pred_check_branch
      %28 = sbr.rel (0) target = $region9
    $region8: #{tpu_custom_call.1} parent=1 // pred_region
      %30 = vsyncadd [#allocation6], 0
      %s31 = sshll.u32 %s1, 4
      %s32 = int_to_ptr.hbm [resolvable:$true] %s31
      %s33 = sshll.u32 [#allocation5], 4
      %s34 = int_to_ptr.vmem [resolvable:$true] %s33
      %39 = dma.hbm_to_vmem [thread:$0]  %s32, 256, %s34, [#allocation6], 128, 128, 8
    $region9: #{tpu_custom_call.1} parent=1 // pred_fallthru
      _
    // Predicated region
    $region10: #{tpu_custom_call.1} parent=1 // pred_check
      _
    $region11: #{tpu_custom_call.1} parent=1 // pred_check_branch
      %41 = sbr.rel (0) target = $region13
    $region12: #{tpu_custom_call.1} parent=1 // pred_region
      %43 = vsyncadd [#allocation6], 0
      %s44 = sshll.u32 %s2, 4
      %s45 = int_to_ptr.hbm [resolvable:$true] %s44
      %s46 = sshll.u32 [#allocation7], 4
      %s47 = int_to_ptr.vmem [resolvable:$true] %s46
      %52 = dma.hbm_to_vmem [thread:$0]  %s45, 2048, %s47, [#allocation6], 128, 128, 8
    $region13: #{tpu_custom_call.1} parent=1 // pred_fallthru
      _
    // Predicated region
    $region14: #{tpu_custom_call.1} parent=1 // pred_check
      _
    $region15: #{tpu_custom_call.1} parent=1 // pred_check_branch
      %54 = sbr.rel (0) target = $region17
    $region16: #{tpu_custom_call.1} parent=1 // pred_region
      %56 = vsyncadd [#allocation9], 0
      %s57 = sshll.u32 %s3, 4
      %s58 = int_to_ptr.hbm [resolvable:$true] %s57
      %s59 = sshll.u32 [#allocation8], 4
      %s60 = int_to_ptr.vmem [resolvable:$true] %s59
      %65 = dma.hbm_to_vmem [thread:$0]  %s58, 2048, %s60, [#allocation9], 128, 128, 8
    $region17: #{tpu_custom_call.1} parent=1 // pred_fallthru
      _
    // Predicated region
    $region18: #{tpu_custom_call.1} parent=1 // pred_check
      _
    $region19: #{tpu_custom_call.1} parent=1 // pred_check_branch
      %67 = sbr.rel (0) target = $region21
    $region20: #{tpu_custom_call.1} parent=1 // pred_region
      %69 = vsyncadd [#allocation9], 0
      %s70 = sshll.u32 %s4, 4
      %s71 = int_to_ptr.hbm [resolvable:$true] %s70
      %s72 = sshll.u32 [#allocation10], 4
      %s73 = int_to_ptr.vmem [resolvable:$true] %s72
      %78 = dma.hbm_to_vmem [thread:$0]  %s71, 2048, %s73, [#allocation9], 128, 128, 8
    $region21: #{tpu_custom_call.1} parent=1 // pred_fallthru
      _
    // Predicated region
    $region22: #{tpu_custom_call.1} parent=1 // pred_check
      _
    $region23: #{tpu_custom_call.1} parent=1 // pred_check_branch
      %80 = sbr.rel (0) target = $region25
    $region24: #{tpu_custom_call.1} parent=1 // pred_region
      %82 = vsyncadd [#allocation12], 0
      %s84 = sshll.u32 %s5, 4
      %s85 = int_to_ptr.hbm [resolvable:$true] %s84
      %s86 = sshll.u32 [#allocation11], 4
      %s87 = int_to_ptr.vmem [resolvable:$true] %s86
      %89 = dma.hbm_to_vmem [thread:$0]  %s85, 128, %s87, [#allocation12]
    $region25: #{tpu_custom_call.1} parent=1 // pred_fallthru
      _
    // Predicated region
    $region26: #{tpu_custom_call.1} parent=1 // pred_check
      _
    $region27: #{tpu_custom_call.1} parent=1 // pred_check_branch
      %91 = sbr.rel (0) target = $region29
    $region28: #{tpu_custom_call.1} parent=1 // pred_region
      %93 = dma.done [#allocation3], 128
    $region29: #{tpu_custom_call.1} parent=1 // pred_fallthru
      _
    // Predicated region
    $region30: #{tpu_custom_call.1} parent=1 // pred_check
      _
    $region31: #{tpu_custom_call.1} parent=1 // pred_check_branch
      %95 = sbr.rel (0) target = $region33
    $region32: #{tpu_custom_call.1} parent=1 // pred_region
      %97 = dma.done [#allocation6], 256
    $region33: #{tpu_custom_call.1} parent=1 // pred_fallthru
      _
    // Predicated region
    $region34: #{tpu_custom_call.1} parent=1 // pred_check
      _
    $region35: #{tpu_custom_call.1} parent=1 // pred_check_branch
      %99 = sbr.rel (0) target = $region37
    $region36: #{tpu_custom_call.1} parent=1 // pred_region
      %101 = dma.done [#allocation6], 2048
    $region37: #{tpu_custom_call.1} parent=1 // pred_fallthru
      _
    // Predicated region
    $region38: #{tpu_custom_call.1} parent=1 // pred_check
      _
    $region39: #{tpu_custom_call.1} parent=1 // pred_check_branch
      %103 = sbr.rel (0) target = $region41
    $region40: #{tpu_custom_call.1} parent=1 // pred_region
      %105 = dma.done [#allocation9], 2048
    $region41: #{tpu_custom_call.1} parent=1 // pred_fallthru
      _
    // Predicated region
    $region42: #{tpu_custom_call.1} parent=1 // pred_check
      _
    $region43: #{tpu_custom_call.1} parent=1 // pred_check_branch
      %107 = sbr.rel (0) target = $region45
    $region44: #{tpu_custom_call.1} parent=1 // pred_region
      %109 = dma.done [#allocation9], 2048
    $region45: #{tpu_custom_call.1} parent=1 // pred_fallthru
      _
    // Predicated region
    $region46: #{tpu_custom_call.1} parent=1 // pred_check
      _
    $region47: #{tpu_custom_call.1} parent=1 // pred_check_branch
      %111 = sbr.rel (0) target = $region49
    $region48: #{tpu_custom_call.1} parent=1 // pred_region
      %113 = dma.done [#allocation12], 128
    $region49: #{tpu_custom_call.1} parent=1 // pred_fallthru
      _
    %v114 = vld [vmem:[#allocation11] sm:$0x1]
    %v115 = vld [vmem:[#allocation11 + $0x1] sm:$0x1]
    %v116 = vld [vmem:[#allocation11 + $0x2] sm:$0x1]
    %v117 = vld [vmem:[#allocation11 + $0x3] sm:$0x1]
    %v118 = vld [vmem:[#allocation2] sm:$0xff]
    %v119 = vld [vmem:[#allocation5] sm:$0xff]
    %v120 = vld [vmem:[#allocation5 + $0x8] sm:$0xff]
    %v121 = vperm.slane %v114, 0
    %vm122 = vcmask 130048
    %v124 = vsel %vm122, %v118, 0
    %126 = vmatpush.msra.mxu0 0.0
    %127 = vmatpush.msra.mxu0 0.0
    %128 = vmatpush.msra.mxu0 0.0
    %129 = vmatpush.msra.mxu0 0.0
    %130 = vmatpush.msra.mxu0 0.0
    %131 = vmatpush.msra.mxu0 0.0
    %132 = vmatpush.msra.mxu0 0.0
    %133 = vmatpush.msra.mxu0 0.0
    %134 = vmatpush.msra.mxu0 0.0
    %135 = vmatpush.msra.mxu0 0.0
    %136 = vmatpush.msra.mxu0 0.0
    %137 = vmatpush.msra.mxu0 0.0
    %138 = vmatpush.msra.mxu0 0.0
    %139 = vmatpush.msra.mxu0 0.0
    %140 = vmatpush.msra.mxu0 %v120
    %141 = vmatpush.msra.mxu0 %v119
    %142 = vmatmul.f32.gmra.mxu0 %v124
    %v143 = vpop.f32.mrf.mxu0
    %v144 = vadd.f32 %v121, %v143
    %145 = vdwg.mxu0
    %v146 = vmax.f32 %v144, 0.0
    %v147 = vld [vmem:[#allocation7] sm:$0xff]
    %v148 = vld [vmem:[#allocation7 + $0x8] sm:$0xff]
    %v149 = vld [vmem:[#allocation7 + $0x10] sm:$0xff]
    %v150 = vld [vmem:[#allocation7 + $0x18] sm:$0xff]
    %v151 = vld [vmem:[#allocation7 + $0x20] sm:$0xff]
    %v152 = vld [vmem:[#allocation7 + $0x28] sm:$0xff]
    %v153 = vld [vmem:[#allocation7 + $0x30] sm:$0xff]
    %v154 = vld [vmem:[#allocation7 + $0x38] sm:$0xff]
    %v155 = vld [vmem:[#allocation7 + $0x40] sm:$0xff]
    %v156 = vld [vmem:[#allocation7 + $0x48] sm:$0xff]
    %v157 = vld [vmem:[#allocation7 + $0x50] sm:$0xff]
    %v158 = vld [vmem:[#allocation7 + $0x58] sm:$0xff]
    %v159 = vld [vmem:[#allocation7 + $0x60] sm:$0xff]
    %v160 = vld [vmem:[#allocation7 + $0x68] sm:$0xff]
    %v161 = vld [vmem:[#allocation7 + $0x70] sm:$0xff]
    %v162 = vld [vmem:[#allocation7 + $0x78] sm:$0xff]
    %v163 = vperm.slane %v115, 0
    %164 = vmatpush.msra.mxu0 %v162
    %165 = vmatpush.msra.mxu0 %v161
    %166 = vmatpush.msra.mxu0 %v160
    %167 = vmatpush.msra.mxu0 %v159
    %168 = vmatpush.msra.mxu0 %v158
    %169 = vmatpush.msra.mxu0 %v157
    %170 = vmatpush.msra.mxu0 %v156
    %171 = vmatpush.msra.mxu0 %v155
    %172 = vmatpush.msra.mxu0 %v154
    %173 = vmatpush.msra.mxu0 %v153
    %174 = vmatpush.msra.mxu0 %v152
    %175 = vmatpush.msra.mxu0 %v151
    %176 = vmatpush.msra.mxu0 %v150
    %177 = vmatpush.msra.mxu0 %v149
    %178 = vmatpush.msra.mxu0 %v148
    %179 = vmatpush.msra.mxu0 %v147
    %180 = vmatmul.f32.gmra.mxu0 %v146
    %v181 = vpop.f32.mrf.mxu0
    %v182 = vadd.f32 %v163, %v181
    %183 = vdwg.mxu0
    %v184 = vmax.f32 %v182, 0.0
    %v185 = vld [vmem:[#allocation8] sm:$0xff]
    %v186 = vld [vmem:[#allocation8 + $0x8] sm:$0xff]
    %v187 = vld [vmem:[#allocation8 + $0x10] sm:$0xff]
    %v188 = vld [vmem:[#allocation8 + $0x18] sm:$0xff]
    %v189 = vld [vmem:[#allocation8 + $0x20] sm:$0xff]
    %v190 = vld [vmem:[#allocation8 + $0x28] sm:$0xff]
    %v191 = vld [vmem:[#allocation8 + $0x30] sm:$0xff]
    %v192 = vld [vmem:[#allocation8 + $0x38] sm:$0xff]
    %v193 = vld [vmem:[#allocation8 + $0x40] sm:$0xff]
    %v194 = vld [vmem:[#allocation8 + $0x48] sm:$0xff]
    %v195 = vld [vmem:[#allocation8 + $0x50] sm:$0xff]
    %v196 = vld [vmem:[#allocation8 + $0x58] sm:$0xff]
    %v197 = vld [vmem:[#allocation8 + $0x60] sm:$0xff]
    %v198 = vld [vmem:[#allocation8 + $0x68] sm:$0xff]
    %v199 = vld [vmem:[#allocation8 + $0x70] sm:$0xff]
    %v200 = vld [vmem:[#allocation8 + $0x78] sm:$0xff]
    %v201 = vperm.slane %v116, 0
    %202 = vmatpush.msra.mxu0 %v200
    %203 = vmatpush.msra.mxu0 %v199
    %204 = vmatpush.msra.mxu0 %v198
    %205 = vmatpush.msra.mxu0 %v197
    %206 = vmatpush.msra.mxu0 %v196
    %207 = vmatpush.msra.mxu0 %v195
    %208 = vmatpush.msra.mxu0 %v194
    %209 = vmatpush.msra.mxu0 %v193
    %210 = vmatpush.msra.mxu0 %v192
    %211 = vmatpush.msra.mxu0 %v191
    %212 = vmatpush.msra.mxu0 %v190
    %213 = vmatpush.msra.mxu0 %v189
    %214 = vmatpush.msra.mxu0 %v188
    %215 = vmatpush.msra.mxu0 %v187
    %216 = vmatpush.msra.mxu0 %v186
    %217 = vmatpush.msra.mxu0 %v185
    %218 = vmatmul.f32.gmra.mxu0 %v184
    %v219 = vpop.f32.mrf.mxu0
    %v220 = vadd.f32 %v201, %v219
    %221 = vdwg.mxu0
    %v222 = vmax.f32 %v220, 0.0
    %v223 = vld [vmem:[#allocation10] sm:$0xff]
    %v224 = vld [vmem:[#allocation10 + $0x8] sm:$0xff]
    %v225 = vld [vmem:[#allocation10 + $0x10] sm:$0xff]
    %v226 = vld [vmem:[#allocation10 + $0x18] sm:$0xff]
    %v227 = vld [vmem:[#allocation10 + $0x20] sm:$0xff]
    %v228 = vld [vmem:[#allocation10 + $0x28] sm:$0xff]
    %v229 = vld [vmem:[#allocation10 + $0x30] sm:$0xff]
    %v230 = vld [vmem:[#allocation10 + $0x38] sm:$0xff]
    %v231 = vld [vmem:[#allocation10 + $0x40] sm:$0xff]
    %v232 = vld [vmem:[#allocation10 + $0x48] sm:$0xff]
    %v233 = vld [vmem:[#allocation10 + $0x50] sm:$0xff]
    %v234 = vld [vmem:[#allocation10 + $0x58] sm:$0xff]
    %v235 = vld [vmem:[#allocation10 + $0x60] sm:$0xff]
    %v236 = vld [vmem:[#allocation10 + $0x68] sm:$0xff]
    %v237 = vld [vmem:[#allocation10 + $0x70] sm:$0xff]
    %v238 = vld [vmem:[#allocation10 + $0x78] sm:$0xff]
    %v239 = vperm.slane %v117, 0
    %240 = vmatpush.msra.mxu0 %v238
    %241 = vmatpush.msra.mxu0 %v237
    %242 = vmatpush.msra.mxu0 %v236
    %243 = vmatpush.msra.mxu0 %v235
    %244 = vmatpush.msra.mxu0 %v234
    %245 = vmatpush.msra.mxu0 %v233
    %246 = vmatpush.msra.mxu0 %v232
    %247 = vmatpush.msra.mxu0 %v231
    %248 = vmatpush.msra.mxu0 %v230
    %249 = vmatpush.msra.mxu0 %v229
    %250 = vmatpush.msra.mxu0 %v228
    %251 = vmatpush.msra.mxu0 %v227
    %252 = vmatpush.msra.mxu0 %v226
    %253 = vmatpush.msra.mxu0 %v225
    %254 = vmatpush.msra.mxu0 %v224
    %255 = vmatpush.msra.mxu0 %v223
    %256 = vmatmul.f32.gmra.mxu0 %v222
    %v257 = vpop.f32.mrf.mxu0
    %v258 = vadd.f32 %v239, %v257
    %259 = vdwg.mxu0
    %260 = vst [vmem:[#allocation13] sm:$0xff] %v258
    // Predicated region
    $region50: #{tpu_custom_call.1} parent=1 // pred_check
      _
    $region51: #{tpu_custom_call.1} parent=1 // pred_check_branch
      %262 = sbr.rel (0) target = $region53
    $region52: #{tpu_custom_call.1} parent=1 // pred_region
      %264 = vsyncadd [#allocation4], 0
      %s266 = sshll.u32 [#allocation13], 4
      %s267 = int_to_ptr.vmem [resolvable:$true] %s266
      %s268 = sshll.u32 %s6, 4
      %s269 = int_to_ptr.hbm [resolvable:$true] %s268
      %271 = dma.vmem_to_hbm [thread:$0]  %s267, 128, %s269, [#allocation4]
    $region53: #{tpu_custom_call.1} parent=1 // pred_fallthru
      _
    // Predicated region
    $region54: #{tpu_custom_call.1} parent=1 // pred_check
      _
    $region55: #{tpu_custom_call.1} parent=1 // pred_check_branch
      %273 = sbr.rel (0) target = $region57
    $region56: #{tpu_custom_call.1} parent=1 // pred_region
      %275 = dma.done [#allocation4], 128
    $region57: #{tpu_custom_call.1} parent=1 // pred_fallthru
      _
    %276 = vsyncpa [#allocation3], 1
    %277 = vsyncpa [#allocation6], 1
    %278 = vsyncpa [#allocation9], 1
    %279 = vsyncpa [#allocation12], 1
    %280 = vsyncpa [#allocation4], 1

</llo_original>
